<compile_context>
chip_gen: v6e
topology: v6e:2x2x1
jax: 0.10.0
libtpu: 0.0.40
codegen_flags: <defaults>
</compile_context>

<pallas_src>
import functools

import jax
import jax.numpy as jnp
from jax.experimental import pallas as pl
from jax.experimental.pallas import tpu as pltpu


def _round_up(x, m):
    return ((x + m - 1) // m) * m


def _default_pool_dtype(mxu_dtype):
    """bf16 pooling only where the VPU/XLU natively handle bf16 (v6e / v7x)."""
    if jnp.dtype(mxu_dtype) == jnp.dtype(jnp.float32):
        return jnp.float32
    try:
        kind = jax.devices()[0].device_kind.lower()
    except Exception:  # pragma: no cover - defensive
        kind = ""
    return mxu_dtype if ("v6" in kind or "v7" in kind) else jnp.float32


# ---------------------------------------------------------------------------
# Pallas kernel
# ---------------------------------------------------------------------------
def mt_sppf_kernel(x_ref, w1_ref, b1_ref, w2_ref, b2_ref, col_ref, o_ref, cat_ref,
                   *, H, W, pool_dtype):
    # x_ref  : (Cin, Pp)      HBM dtype (f32)    w1_ref: (C_, Cin)      mxu_dtype
    # b1_ref : (C_, 1) f32    w2_ref: (Cout, 4*C_) mxu_dtype           b2_ref: (Cout, 1) f32
    # col_ref: (1, Pp) int32  -- column index (p % W) of every flattened pixel
    # o_ref  : (Cout, Pp)     cat_ref: (4*C_, Pp) mxu_dtype VMEM scratch
    Pp = x_ref.shape[-1]          # lane-padded H*W (multiple of 128)
    C_ = w1_ref.shape[0]          # sublane-padded c_

    # ---- cv1: 1x1 conv (BN folded) + ReLU; channels on sublanes, pixels on lanes ----
    # Cast x to the MXU dtype in-kernel (no separate wrapper-side convert pass over HBM).
    x = x_ref[...].astype(w1_ref.dtype)
    h = jnp.dot(w1_ref[...], x, preferred_element_type=jnp.float32)
    h = jnp.maximum(h + b1_ref[...], 0.0)                      # (C_, Pp) f32, >= 0
    h = h.astype(pool_dtype)                                    # bf16 pooling on v6e/v7x

    # ---- boundary masks for the separable 5-tap pools: (1, Pp) only, broadcast later ----
    lane = jax.lax.broadcasted_iota(jnp.int32, (1, Pp), 1)      # flattened pixel index
    col = col_ref[...]                                          # (1, Pp) pixel % W
    row_lo = {d: lane >= d * W for d in (1, 2)}                 # row - d >= 0
    row_hi = {d: lane < (H - d) * W for d in (1, 2)}            # row + d <  H
    col_lo = {d: col >= d for d in (1, 2)}                      # col - d >= 0
    col_hi = {d: col < (W - d) for d in (1, 2)}                 # col + d <  W

    zero = jnp.zeros((), pool_dtype)

    def pool5(a):
        # 5x5 / stride-1 / pad-2 max pool on a row-major flattened (C_, H*W) slab,
        # separable into a 5-tap row pass and a 5-tap column pass built from XLU rolls.
        # `a` is post-ReLU (>= 0), so 0 is a valid padding identity for masked-out taps.
        r = a
        for d in (1, 2):
            up = jnp.where(row_lo[d], pltpu.roll(a, shift=d * W, axis=1), zero)
            dn = jnp.where(row_hi[d], pltpu.roll(a, shift=Pp - d * W, axis=1), zero)
            r = jnp.maximum(r, jnp.maximum(up, dn))
        o = r
        for d in (1, 2):
            lf = jnp.where(col_lo[d], pltpu.roll(r, shift=d, axis=1), zero)
            rt = jnp.where(col_hi[d], pltpu.roll(r, shift=Pp - d, axis=1), zero)
            o = jnp.maximum(o, jnp.maximum(lf, rt))
        return o

    # ---- cascaded pools, interleaved with the concat-slab stores (limits live vregs) ----
    cat_dtype = cat_ref.dtype
    cat_ref[0 * C_:1 * C_, :] = h.astype(cat_dtype)
    y1 = pool5(h)
    cat_ref[1 * C_:2 * C_, :] = y1.astype(cat_dtype)
    y2 = pool5(y1)
    cat_ref[2 * C_:3 * C_, :] = y2.astype(cat_dtype)
    y3 = pool5(y2)
    cat_ref[3 * C_:4 * C_, :] = y3.astype(cat_dtype)

    # ---- cv2: one merged (Cout, 4*C_) x (4*C_, Pp) MXU matmul + bias + ReLU ----
    out = jnp.dot(w2_ref[...], cat_ref[...], preferred_element_type=jnp.float32)
    out = jnp.maximum(out + b2_ref[...], 0.0)
    o_ref[...] = out.astype(o_ref.dtype)                        # lane-dense, unmasked store


# ---------------------------------------------------------------------------
# Wrapper (NCHW in / NCHW out, PyTorch layout)
# ---------------------------------------------------------------------------
def mt_sppf_forward(x_nchw, w1_t, b1, w2_t, b2, *,
                    mxu_dtype=jnp.bfloat16, out_dtype=jnp.float32, pool_dtype=None):
    """x_nchw: (N, Cin, H, W) f32 -> (N, Cout, H, W) out_dtype."""
    N, Cin, H, W = x_nchw.shape
    C_ = w1_t.shape[0]
    Cout = w2_t.shape[0]
    P = H * W
    Pp = _round_up(P, 128)                       # full 128-lane vregs / unmasked stores

    if pool_dtype is None:
        pool_dtype = _default_pool_dtype(mxu_dtype)

    itm = jnp.dtype(mxu_dtype).itemsize
    sub_c = 16 if itm == 2 else 8                # sublane quantum of the cat slab dtype
    sub_o = 16 if jnp.dtype(out_dtype).itemsize == 2 else 8
    C_p = _round_up(C_, sub_c)
    Cout_p = _round_up(Cout, sub_o)

    # Flatten NCHW -> (N, Cin, H*W); keep HBM dtype (the kernel casts under the MXU).
    x_flat = x_nchw.reshape(N, Cin, P)
    if Pp != P:
        x_flat = jnp.pad(x_flat, ((0, 0), (0, 0), (0, Pp - P)))

    # Fold the channel padding into the (BN-folded) weights: zero rows/cols are exact.
    w1c = jnp.pad(w1_t, ((0, C_p - C_), (0, 0))).astype(mxu_dtype)           # (C_p, Cin)
    b1p = jnp.pad(b1, ((0, C_p - C_), (0, 0)))                               # (C_p, 1) f32
    w2r = jnp.pad(w2_t.reshape(Cout, 4, C_),
                  ((0, Cout_p - Cout), (0, 0), (0, C_p - C_)))
    w2c = w2r.reshape(Cout_p, 4 * C_p).astype(mxu_dtype)                     # (Cout_p, 4*C_p)
    b2p = jnp.pad(b2, ((0, Cout_p - Cout), (0, 0)))                          # (Cout_p, 1) f32

    col_idx = (jnp.arange(Pp, dtype=jnp.int32) % W).reshape(1, Pp)

    kernel = functools.partial(mt_sppf_kernel, H=H, W=W, pool_dtype=pool_dtype)

    # Explicit VMEM budget: double-buffered x/out blocks + single cat slab + resident weights.
    x_itm = jnp.dtype(x_nchw.dtype).itemsize
    o_itm = jnp.dtype(out_dtype).itemsize
    vmem_need = (2 * Cin * Pp * x_itm
                 + 2 * Cout_p * Pp * o_itm
                 + 4 * C_p * Pp * itm
                 + (C_p * Cin + Cout_p * 4 * C_p) * itm
                 + (C_p + Cout_p) * 4 + Pp * 4)
    vmem_limit = int(min(96 << 20, max(32 << 20, 2 * vmem_need + (4 << 20))))

    cost = pl.CostEstimate(
        flops=int(N * Pp * (2 * C_p * Cin + 2 * Cout_p * 4 * C_p + 48 * C_p)),
        transcendentals=0,
        bytes_accessed=int(N * Pp * (Cin * x_itm + Cout_p * o_itm)
                           + (w1c.size + w2c.size) * itm
                           + (b1p.size + b2p.size) * 4 + Pp * 4),
    )

    def const_spec(shape):
        # Grid-invariant operand: no double-buffering (saves VMEM for the cv2 weight).
        return pl.BlockSpec(shape, lambda n: (0,) * len(shape),
                            pipeline_mode=pl.Buffered(1))

    out = pl.pallas_call(
        kernel,
        out_shape=jax.ShapeDtypeStruct((N, Cout_p, Pp), out_dtype),
        grid_spec=pltpu.PrefetchScalarGridSpec(
            num_scalar_prefetch=0,
            grid=(N,),
            in_specs=[
                pl.BlockSpec((None, Cin, Pp), lambda n: (n, 0, 0)),  # per-image activations
                const_spec((C_p, Cin)),                               # cv1 weight (resident)
                const_spec((C_p, 1)),                                 # cv1 folded-BN bias
                const_spec((Cout_p, 4 * C_p)),                        # cv2 weight (resident)
                const_spec((Cout_p, 1)),                              # cv2 folded-BN bias
                const_spec((1, Pp)),                                  # column-index vector
            ],
            out_specs=pl.BlockSpec((None, Cout_p, Pp), lambda n: (n, 0, 0)),
            scratch_shapes=[pltpu.VMEM((4 * C_p, Pp), mxu_dtype)],    # bf16 concat slab
        ),
        compiler_params=pltpu.CompilerParams(
            dimension_semantics=("parallel",),
            vmem_limit_bytes=vmem_limit),
        cost_estimate=cost,
    )(x_flat, w1c, b1p, w2c, b2p, col_idx)

    return out[:, :Cout, :P].reshape(N, Cout, H, W)


# ---------------------------------------------------------------------------
# Deterministic synthetic parameters (Conv weights + BN stats folded, eval mode)
# ---------------------------------------------------------------------------
def make_params(key, in_channels, out_channels, eps=1e-5):
    c_ = in_channels // 2
    ks = jax.random.split(key, 10)
    # cv1: Conv2d(in_channels, c_, 1, bias=False) + BatchNorm2d(c_)
    w1 = 0.2 * jax.random.normal(ks[0], (c_, in_channels), jnp.float32)
    g1 = 1.0 + 0.1 * jax.random.normal(ks[1], (c_,), jnp.float32)
    beta1 = 0.1 * jax.random.normal(ks[2], (c_,), jnp.float32)
    mu1 = 0.1 * jax.random.normal(ks[3], (c_,), jnp.float32)
    var1 = 0.5 + jax.nn.softplus(jax.random.normal(ks[4], (c_,), jnp.float32))
    s1 = g1 / jnp.sqrt(var1 + eps)
    w1_eff = w1 * s1[:, None]                  # (c_, in_channels)
    b1_eff = (beta1 - mu1 * s1)[:, None]       # (c_, 1)
    # cv2: Conv2d(4*c_, out_channels, 1, bias=False) + BatchNorm2d(out_channels)
    w2 = 0.2 * jax.random.normal(ks[5], (out_channels, 4 * c_), jnp.float32)
    g2 = 1.0 + 0.1 * jax.random.normal(ks[6], (out_channels,), jnp.float32)
    beta2 = 0.1 * jax.random.normal(ks[7], (out_channels,), jnp.float32)
    mu2 = 0.1 * jax.random.normal(ks[8], (out_channels,), jnp.float32)
    var2 = 0.5 + jax.nn.softplus(jax.random.normal(ks[9], (out_channels,), jnp.float32))
    s2 = g2 / jnp.sqrt(var2 + eps)
    w2_eff = w2 * s2[:, None]                  # (out_channels, 4*c_)
    b2_eff = (beta2 - mu2 * s2)[:, None]       # (out_channels, 1)
    return w1_eff, b1_eff, w2_eff, b2_eff


# ---------------------------------------------------------------------------
# Pure-JAX reference (NCHW, matches the PyTorch forward in eval mode)
# ---------------------------------------------------------------------------
def ref_forward_nchw(x, w1_eff, b1_eff, w2_eff, b2_eff):
    h = jnp.einsum("nchw,dc->ndhw", x, w1_eff) + b1_eff[:, 0][None, :, None, None]
    h = jnp.maximum(h, 0.0)

    def mp(a):
        return jax.lax.reduce_window(
            a, -jnp.inf, jax.lax.max,
            window_dimensions=(1, 1, 5, 5), window_strides=(1, 1, 1, 1),
            padding=((0, 0), (0, 0), (2, 2), (2, 2)))

    y1 = mp(h)
    y2 = mp(y1)
    y3 = mp(y2)
    cat = jnp.concatenate([h, y1, y2, y3], axis=1)
    o = jnp.einsum("nchw,dc->ndhw", cat, w2_eff) + b2_eff[:, 0][None, :, None, None]
    return jnp.maximum(o, 0.0)


if __name__ == "__main__":
    key = jax.random.PRNGKey(0)

    def run_case(name, N, Cin, H, W, Cout, case_key):
        kx, kp = jax.random.split(case_key)
        x_nchw = jax.random.normal(kx, (N, Cin, H, W), jnp.float32)
        w1, b1, w2, b2 = make_params(kp, Cin, Cout)
        ref = ref_forward_nchw(x_nchw, w1, b1, w2, b2)

        # f32 MXU-operand path: tight structural/numerical check (pooling in f32 too).
        out_f32 = jax.block_until_ready(
            mt_sppf_forward(x_nchw, w1, b1, w2, b2, mxu_dtype=jnp.float32))
        assert out_f32.shape == (N, Cout, H, W), (name, out_f32.shape)
        assert jnp.allclose(out_f32, ref, atol=5e-3, rtol=5e-3), f"{name}: f32 path mismatch"

        # bf16 MXU-operand perf path (bf16 cat slab; bf16 pooling on v6e/v7x, f32 on v5e).
        out_bf16 = jax.block_until_ready(
            mt_sppf_forward(x_nchw, w1, b1, w2, b2, mxu_dtype=jnp.bfloat16))
        assert out_bf16.shape == (N, Cout, H, W), (name, out_bf16.shape)
        assert jnp.allclose(out_bf16, ref, atol=8e-2, rtol=8e-2), f"{name}: bf16 path mismatch"

    k1, k2 = jax.random.split(key)
    # Original toy config (P = 256, multiple of 128; c_ = 2 padded to 8/16 sublanes).
    run_case("16x16", N=2, Cin=4, H=16, W=16, Cout=8, case_key=k1)
    # Non-multiple-of-128 resolution + odd channel counts: exercises the lane padding
    # (P = 400 -> 512) interacting with the lane-axis rolls/masks, and the channel padding
    # (c_ = 3 -> 8/16, Cout = 10 -> 16), per the review's correctness concern.
    run_case("20x20", N=1, Cin=6, H=20, W=20, Cout=10, case_key=k2)

    print("KERNEL_OK")
</pallas_src>

<mosaic_0001>
module attributes {stable_mosaic.version = 11 : i64} {
  func.func @mt_sppf_kernel(%arg0: i32, %arg1: memref<1x4x256xf32, #tpu.memory_space<vmem>>, %arg2: memref<8x4xf32, #tpu.memory_space<vmem>>, %arg3: memref<8x1xf32, #tpu.memory_space<vmem>>, %arg4: memref<8x32xf32, #tpu.memory_space<vmem>>, %arg5: memref<8x1xf32, #tpu.memory_space<vmem>>, %arg6: memref<1x256xi32, #tpu.memory_space<vmem>>, %arg7: memref<1x8x256xf32, #tpu.memory_space<vmem>>, %arg8: memref<32x256xf32, #tpu.memory_space<vmem>>) attributes {dimension_semantics = [#tpu.dimension_semantics<parallel>], iteration_bounds = array<i64: 2>, scalar_prefetch = 0 : i64, scratch_operands = 1 : i64, tpu.core_type = #tpu.core_type<tc>, window_params = [{transform_indices = @transform_0, window_bounds = array<i64: 1, 4, 256>}, {pipeline_mode = #tpu.pipeline_mode<synchronous>, transform_indices = @transform_1, window_bounds = array<i64: 8, 4>}, {pipeline_mode = #tpu.pipeline_mode<synchronous>, transform_indices = @transform_2, window_bounds = array<i64: 8, 1>}, {pipeline_mode = #tpu.pipeline_mode<synchronous>, transform_indices = @transform_3, window_bounds = array<i64: 8, 32>}, {pipeline_mode = #tpu.pipeline_mode<synchronous>, transform_indices = @transform_4, window_bounds = array<i64: 8, 1>}, {pipeline_mode = #tpu.pipeline_mode<synchronous>, transform_indices = @transform_5, window_bounds = array<i64: 1, 256>}, {transform_indices = @transform_6, window_bounds = array<i64: 1, 8, 256>}]} {
    %c0 = arith.constant 0 : index
    %c0_0 = arith.constant 0 : index
    %c0_1 = arith.constant 0 : index
    %0 = vector.load %arg1[%c0, %c0_0, %c0_1] : memref<1x4x256xf32, #tpu.memory_space<vmem>>, vector<1x4x256xf32>
    %1 = vector.shape_cast %0 : vector<1x4x256xf32> to vector<4x256xf32>
    %c0_2 = arith.constant 0 : index
    %c0_3 = arith.constant 0 : index
    %2 = vector.load %arg2[%c0_2, %c0_3] : memref<8x4xf32, #tpu.memory_space<vmem>>, vector<8x4xf32>
    %cst = arith.constant dense<0.000000e+00> : vector<8x256xf32>
    %3 = tpu.matmul %2, %1, %cst {dimension_numbers = #tpu.dot_dimension_numbers<[1], [0], [0], [1], [0, 0, 1, 1], [], []>} : vector<8x4xf32>, vector<4x256xf32>, vector<8x256xf32> -> vector<8x256xf32>
    %c0_4 = arith.constant 0 : index
    %c0_5 = arith.constant 0 : index
    %4 = vector.load %arg3[%c0_4, %c0_5] : memref<8x1xf32, #tpu.memory_space<vmem>>, vector<8x1xf32>
    %5 = vector.broadcast %4 : vector<8x1xf32> to vector<8x256xf32>
    %6 = arith.addf %3, %5 : vector<8x256xf32>
    %cst_6 = arith.constant 0.000000e+00 : f32
    %7 = vector.broadcast %cst_6 : f32 to vector<8x256xf32>
    %8 = arith.maximumf %6, %7 : vector<8x256xf32>
    %9 = tpu.iota {dimensions = array<i32: 1>} : vector<1x256xi32>
    %c0_7 = arith.constant 0 : index
    %c0_8 = arith.constant 0 : index
    %10 = vector.load %arg6[%c0_7, %c0_8] : memref<1x256xi32, #tpu.memory_space<vmem>>, vector<1x256xi32>
    %c16_i32 = arith.constant 16 : i32
    %11 = vector.broadcast %c16_i32 : i32 to vector<1x256xi32>
    %12 = arith.cmpi sge, %9, %11 : vector<1x256xi32>
    %c32_i32 = arith.constant 32 : i32
    %13 = vector.broadcast %c32_i32 : i32 to vector<1x256xi32>
    %14 = arith.cmpi sge, %9, %13 : vector<1x256xi32>
    %c240_i32 = arith.constant 240 : i32
    %15 = vector.broadcast %c240_i32 : i32 to vector<1x256xi32>
    %16 = arith.cmpi slt, %9, %15 : vector<1x256xi32>
    %c224_i32 = arith.constant 224 : i32
    %17 = vector.broadcast %c224_i32 : i32 to vector<1x256xi32>
    %18 = arith.cmpi slt, %9, %17 : vector<1x256xi32>
    %c1_i32 = arith.constant 1 : i32
    %19 = vector.broadcast %c1_i32 : i32 to vector<1x256xi32>
    %20 = arith.cmpi sge, %10, %19 : vector<1x256xi32>
    %c2_i32 = arith.constant 2 : i32
    %21 = vector.broadcast %c2_i32 : i32 to vector<1x256xi32>
    %22 = arith.cmpi sge, %10, %21 : vector<1x256xi32>
    %c15_i32 = arith.constant 15 : i32
    %23 = vector.broadcast %c15_i32 : i32 to vector<1x256xi32>
    %24 = arith.cmpi slt, %10, %23 : vector<1x256xi32>
    %c14_i32 = arith.constant 14 : i32
    %25 = vector.broadcast %c14_i32 : i32 to vector<1x256xi32>
    %26 = arith.cmpi slt, %10, %25 : vector<1x256xi32>
    %c0_9 = arith.constant 0 : index
    %c0_10 = arith.constant 0 : index
    %27 = vector.load %arg8[%c0_9, %c0_10] : memref<32x256xf32, #tpu.memory_space<vmem>>, vector<8x256xf32>
    tpu.vector_store %arg8[%c0_9, %c0_10], %8 {strides = array<i32>} : memref<32x256xf32, #tpu.memory_space<vmem>>, vector<8x256xf32>,
    %c16_i32_11 = arith.constant 16 : i32
    %28 = tpu.dynamic_rotate %8 by %c16_i32_11 dim 1 : vector<8x256xf32>, i32 -> vector<8x256xf32>
    %cst_12 = arith.constant 0.000000e+00 : f32
    %29 = vector.shape_cast %12 : vector<1x256xi1> to vector<1x256xi1>
    %30 = vector.broadcast %29 : vector<1x256xi1> to vector<8x256xi1>
    %31 = vector.broadcast %cst_12 : f32 to vector<8x256xf32>
    %32 = arith.select %30, %28, %31 : vector<8x256xi1>, vector<8x256xf32>
    %c240_i32_13 = arith.constant 240 : i32
    %33 = tpu.dynamic_rotate %8 by %c240_i32_13 dim 1 : vector<8x256xf32>, i32 -> vector<8x256xf32>
    %cst_14 = arith.constant 0.000000e+00 : f32
    %34 = vector.shape_cast %16 : vector<1x256xi1> to vector<1x256xi1>
    %35 = vector.broadcast %34 : vector<1x256xi1> to vector<8x256xi1>
    %36 = vector.broadcast %cst_14 : f32 to vector<8x256xf32>
    %37 = arith.select %35, %33, %36 : vector<8x256xi1>, vector<8x256xf32>
    %38 = arith.maximumf %32, %37 : vector<8x256xf32>
    %39 = arith.maximumf %8, %38 : vector<8x256xf32>
    %c32_i32_15 = arith.constant 32 : i32
    %40 = tpu.dynamic_rotate %8 by %c32_i32_15 dim 1 : vector<8x256xf32>, i32 -> vector<8x256xf32>
    %cst_16 = arith.constant 0.000000e+00 : f32
    %41 = vector.shape_cast %14 : vector<1x256xi1> to vector<1x256xi1>
    %42 = vector.broadcast %41 : vector<1x256xi1> to vector<8x256xi1>
    %43 = vector.broadcast %cst_16 : f32 to vector<8x256xf32>
    %44 = arith.select %42, %40, %43 : vector<8x256xi1>, vector<8x256xf32>
    %c224_i32_17 = arith.constant 224 : i32
    %45 = tpu.dynamic_rotate %8 by %c224_i32_17 dim 1 : vector<8x256xf32>, i32 -> vector<8x256xf32>
    %cst_18 = arith.constant 0.000000e+00 : f32
    %46 = vector.shape_cast %18 : vector<1x256xi1> to vector<1x256xi1>
    %47 = vector.broadcast %46 : vector<1x256xi1> to vector<8x256xi1>
    %48 = vector.broadcast %cst_18 : f32 to vector<8x256xf32>
    %49 = arith.select %47, %45, %48 : vector<8x256xi1>, vector<8x256xf32>
    %50 = arith.maximumf %44, %49 : vector<8x256xf32>
    %51 = arith.maximumf %39, %50 : vector<8x256xf32>
    %c1_i32_19 = arith.constant 1 : i32
    %52 = tpu.dynamic_rotate %51 by %c1_i32_19 dim 1 : vector<8x256xf32>, i32 -> vector<8x256xf32>
    %cst_20 = arith.constant 0.000000e+00 : f32
    %53 = vector.shape_cast %20 : vector<1x256xi1> to vector<1x256xi1>
    %54 = vector.broadcast %53 : vector<1x256xi1> to vector<8x256xi1>
    %55 = vector.broadcast %cst_20 : f32 to vector<8x256xf32>
    %56 = arith.select %54, %52, %55 : vector<8x256xi1>, vector<8x256xf32>
    %c255_i32 = arith.constant 255 : i32
    %57 = tpu.dynamic_rotate %51 by %c255_i32 dim 1 : vector<8x256xf32>, i32 -> vector<8x256xf32>
    %cst_21 = arith.constant 0.000000e+00 : f32
    %58 = vector.shape_cast %24 : vector<1x256xi1> to vector<1x256xi1>
    %59 = vector.broadcast %58 : vector<1x256xi1> to vector<8x256xi1>
    %60 = vector.broadcast %cst_21 : f32 to vector<8x256xf32>
    %61 = arith.select %59, %57, %60 : vector<8x256xi1>, vector<8x256xf32>
    %62 = arith.maximumf %56, %61 : vector<8x256xf32>
    %63 = arith.maximumf %51, %62 : vector<8x256xf32>
    %c2_i32_22 = arith.constant 2 : i32
    %64 = tpu.dynamic_rotate %51 by %c2_i32_22 dim 1 : vector<8x256xf32>, i32 -> vector<8x256xf32>
    %cst_23 = arith.constant 0.000000e+00 : f32
    %65 = vector.shape_cast %22 : vector<1x256xi1> to vector<1x256xi1>
    %66 = vector.broadcast %65 : vector<1x256xi1> to vector<8x256xi1>
    %67 = vector.broadcast %cst_23 : f32 to vector<8x256xf32>
    %68 = arith.select %66, %64, %67 : vector<8x256xi1>, vector<8x256xf32>
    %c254_i32 = arith.constant 254 : i32
    %69 = tpu.dynamic_rotate %51 by %c254_i32 dim 1 : vector<8x256xf32>, i32 -> vector<8x256xf32>
    %cst_24 = arith.constant 0.000000e+00 : f32
    %70 = vector.shape_cast %26 : vector<1x256xi1> to vector<1x256xi1>
    %71 = vector.broadcast %70 : vector<1x256xi1> to vector<8x256xi1>
    %72 = vector.broadcast %cst_24 : f32 to vector<8x256xf32>
    %73 = arith.select %71, %69, %72 : vector<8x256xi1>, vector<8x256xf32>
    %74 = arith.maximumf %68, %73 : vector<8x256xf32>
    %75 = arith.maximumf %63, %74 : vector<8x256xf32>
    %c8 = arith.constant 8 : index
    %c0_25 = arith.constant 0 : index
    %76 = vector.load %arg8[%c8, %c0_25] : memref<32x256xf32, #tpu.memory_space<vmem>>, vector<8x256xf32>
    tpu.vector_store %arg8[%c8, %c0_25], %75 {strides = array<i32>} : memref<32x256xf32, #tpu.memory_space<vmem>>, vector<8x256xf32>,
    %c16_i32_26 = arith.constant 16 : i32
    %77 = tpu.dynamic_rotate %75 by %c16_i32_26 dim 1 : vector<8x256xf32>, i32 -> vector<8x256xf32>
    %cst_27 = arith.constant 0.000000e+00 : f32
    %78 = vector.shape_cast %12 : vector<1x256xi1> to vector<1x256xi1>
    %79 = vector.broadcast %78 : vector<1x256xi1> to vector<8x256xi1>
    %80 = vector.broadcast %cst_27 : f32 to vector<8x256xf32>
    %81 = arith.select %79, %77, %80 : vector<8x256xi1>, vector<8x256xf32>
    %c240_i32_28 = arith.constant 240 : i32
    %82 = tpu.dynamic_rotate %75 by %c240_i32_28 dim 1 : vector<8x256xf32>, i32 -> vector<8x256xf32>
    %cst_29 = arith.constant 0.000000e+00 : f32
    %83 = vector.shape_cast %16 : vector<1x256xi1> to vector<1x256xi1>
    %84 = vector.broadcast %83 : vector<1x256xi1> to vector<8x256xi1>
    %85 = vector.broadcast %cst_29 : f32 to vector<8x256xf32>
    %86 = arith.select %84, %82, %85 : vector<8x256xi1>, vector<8x256xf32>
    %87 = arith.maximumf %81, %86 : vector<8x256xf32>
    %88 = arith.maximumf %75, %87 : vector<8x256xf32>
    %c32_i32_30 = arith.constant 32 : i32
    %89 = tpu.dynamic_rotate %75 by %c32_i32_30 dim 1 : vector<8x256xf32>, i32 -> vector<8x256xf32>
    %cst_31 = arith.constant 0.000000e+00 : f32
    %90 = vector.shape_cast %14 : vector<1x256xi1> to vector<1x256xi1>
    %91 = vector.broadcast %90 : vector<1x256xi1> to vector<8x256xi1>
    %92 = vector.broadcast %cst_31 : f32 to vector<8x256xf32>
    %93 = arith.select %91, %89, %92 : vector<8x256xi1>, vector<8x256xf32>
    %c224_i32_32 = arith.constant 224 : i32
    %94 = tpu.dynamic_rotate %75 by %c224_i32_32 dim 1 : vector<8x256xf32>, i32 -> vector<8x256xf32>
    %cst_33 = arith.constant 0.000000e+00 : f32
    %95 = vector.shape_cast %18 : vector<1x256xi1> to vector<1x256xi1>
    %96 = vector.broadcast %95 : vector<1x256xi1> to vector<8x256xi1>
    %97 = vector.broadcast %cst_33 : f32 to vector<8x256xf32>
    %98 = arith.select %96, %94, %97 : vector<8x256xi1>, vector<8x256xf32>
    %99 = arith.maximumf %93, %98 : vector<8x256xf32>
    %100 = arith.maximumf %88, %99 : vector<8x256xf32>
    %c1_i32_34 = arith.constant 1 : i32
    %101 = tpu.dynamic_rotate %100 by %c1_i32_34 dim 1 : vector<8x256xf32>, i32 -> vector<8x256xf32>
    %cst_35 = arith.constant 0.000000e+00 : f32
    %102 = vector.shape_cast %20 : vector<1x256xi1> to vector<1x256xi1>
    %103 = vector.broadcast %102 : vector<1x256xi1> to vector<8x256xi1>
    %104 = vector.broadcast %cst_35 : f32 to vector<8x256xf32>
    %105 = arith.select %103, %101, %104 : vector<8x256xi1>, vector<8x256xf32>
    %c255_i32_36 = arith.constant 255 : i32
    %106 = tpu.dynamic_rotate %100 by %c255_i32_36 dim 1 : vector<8x256xf32>, i32 -> vector<8x256xf32>
    %cst_37 = arith.constant 0.000000e+00 : f32
    %107 = vector.shape_cast %24 : vector<1x256xi1> to vector<1x256xi1>
    %108 = vector.broadcast %107 : vector<1x256xi1> to vector<8x256xi1>
    %109 = vector.broadcast %cst_37 : f32 to vector<8x256xf32>
    %110 = arith.select %108, %106, %109 : vector<8x256xi1>, vector<8x256xf32>
    %111 = arith.maximumf %105, %110 : vector<8x256xf32>
    %112 = arith.maximumf %100, %111 : vector<8x256xf32>
    %c2_i32_38 = arith.constant 2 : i32
    %113 = tpu.dynamic_rotate %100 by %c2_i32_38 dim 1 : vector<8x256xf32>, i32 -> vector<8x256xf32>
    %cst_39 = arith.constant 0.000000e+00 : f32
    %114 = vector.shape_cast %22 : vector<1x256xi1> to vector<1x256xi1>
    %115 = vector.broadcast %114 : vector<1x256xi1> to vector<8x256xi1>
    %116 = vector.broadcast %cst_39 : f32 to vector<8x256xf32>
    %117 = arith.select %115, %113, %116 : vector<8x256xi1>, vector<8x256xf32>
    %c254_i32_40 = arith.constant 254 : i32
    %118 = tpu.dynamic_rotate %100 by %c254_i32_40 dim 1 : vector<8x256xf32>, i32 -> vector<8x256xf32>
    %cst_41 = arith.constant 0.000000e+00 : f32
    %119 = vector.shape_cast %26 : vector<1x256xi1> to vector<1x256xi1>
    %120 = vector.broadcast %119 : vector<1x256xi1> to vector<8x256xi1>
    %121 = vector.broadcast %cst_41 : f32 to vector<8x256xf32>
    %122 = arith.select %120, %118, %121 : vector<8x256xi1>, vector<8x256xf32>
    %123 = arith.maximumf %117, %122 : vector<8x256xf32>
    %124 = arith.maximumf %112, %123 : vector<8x256xf32>
    %c16 = arith.constant 16 : index
    %c0_42 = arith.constant 0 : index
    %125 = vector.load %arg8[%c16, %c0_42] : memref<32x256xf32, #tpu.memory_space<vmem>>, vector<8x256xf32>
    tpu.vector_store %arg8[%c16, %c0_42], %124 {strides = array<i32>} : memref<32x256xf32, #tpu.memory_space<vmem>>, vector<8x256xf32>,
    %c16_i32_43 = arith.constant 16 : i32
    %126 = tpu.dynamic_rotate %124 by %c16_i32_43 dim 1 : vector<8x256xf32>, i32 -> vector<8x256xf32>
    %cst_44 = arith.constant 0.000000e+00 : f32
    %127 = vector.shape_cast %12 : vector<1x256xi1> to vector<1x256xi1>
    %128 = vector.broadcast %127 : vector<1x256xi1> to vector<8x256xi1>
    %129 = vector.broadcast %cst_44 : f32 to vector<8x256xf32>
    %130 = arith.select %128, %126, %129 : vector<8x256xi1>, vector<8x256xf32>
    %c240_i32_45 = arith.constant 240 : i32
    %131 = tpu.dynamic_rotate %124 by %c240_i32_45 dim 1 : vector<8x256xf32>, i32 -> vector<8x256xf32>
    %cst_46 = arith.constant 0.000000e+00 : f32
    %132 = vector.shape_cast %16 : vector<1x256xi1> to vector<1x256xi1>
    %133 = vector.broadcast %132 : vector<1x256xi1> to vector<8x256xi1>
    %134 = vector.broadcast %cst_46 : f32 to vector<8x256xf32>
    %135 = arith.select %133, %131, %134 : vector<8x256xi1>, vector<8x256xf32>
    %136 = arith.maximumf %130, %135 : vector<8x256xf32>
    %137 = arith.maximumf %124, %136 : vector<8x256xf32>
    %c32_i32_47 = arith.constant 32 : i32
    %138 = tpu.dynamic_rotate %124 by %c32_i32_47 dim 1 : vector<8x256xf32>, i32 -> vector<8x256xf32>
    %cst_48 = arith.constant 0.000000e+00 : f32
    %139 = vector.shape_cast %14 : vector<1x256xi1> to vector<1x256xi1>
    %140 = vector.broadcast %139 : vector<1x256xi1> to vector<8x256xi1>
    %141 = vector.broadcast %cst_48 : f32 to vector<8x256xf32>
    %142 = arith.select %140, %138, %141 : vector<8x256xi1>, vector<8x256xf32>
    %c224_i32_49 = arith.constant 224 : i32
    %143 = tpu.dynamic_rotate %124 by %c224_i32_49 dim 1 : vector<8x256xf32>, i32 -> vector<8x256xf32>
    %cst_50 = arith.constant 0.000000e+00 : f32
    %144 = vector.shape_cast %18 : vector<1x256xi1> to vector<1x256xi1>
    %145 = vector.broadcast %144 : vector<1x256xi1> to vector<8x256xi1>
    %146 = vector.broadcast %cst_50 : f32 to vector<8x256xf32>
    %147 = arith.select %145, %143, %146 : vector<8x256xi1>, vector<8x256xf32>
    %148 = arith.maximumf %142, %147 : vector<8x256xf32>
    %149 = arith.maximumf %137, %148 : vector<8x256xf32>
    %c1_i32_51 = arith.constant 1 : i32
    %150 = tpu.dynamic_rotate %149 by %c1_i32_51 dim 1 : vector<8x256xf32>, i32 -> vector<8x256xf32>
    %cst_52 = arith.constant 0.000000e+00 : f32
    %151 = vector.shape_cast %20 : vector<1x256xi1> to vector<1x256xi1>
    %152 = vector.broadcast %151 : vector<1x256xi1> to vector<8x256xi1>
    %153 = vector.broadcast %cst_52 : f32 to vector<8x256xf32>
    %154 = arith.select %152, %150, %153 : vector<8x256xi1>, vector<8x256xf32>
    %c255_i32_53 = arith.constant 255 : i32
    %155 = tpu.dynamic_rotate %149 by %c255_i32_53 dim 1 : vector<8x256xf32>, i32 -> vector<8x256xf32>
    %cst_54 = arith.constant 0.000000e+00 : f32
    %156 = vector.shape_cast %24 : vector<1x256xi1> to vector<1x256xi1>
    %157 = vector.broadcast %156 : vector<1x256xi1> to vector<8x256xi1>
    %158 = vector.broadcast %cst_54 : f32 to vector<8x256xf32>
    %159 = arith.select %157, %155, %158 : vector<8x256xi1>, vector<8x256xf32>
    %160 = arith.maximumf %154, %159 : vector<8x256xf32>
    %161 = arith.maximumf %149, %160 : vector<8x256xf32>
    %c2_i32_55 = arith.constant 2 : i32
    %162 = tpu.dynamic_rotate %149 by %c2_i32_55 dim 1 : vector<8x256xf32>, i32 -> vector<8x256xf32>
    %cst_56 = arith.constant 0.000000e+00 : f32
    %163 = vector.shape_cast %22 : vector<1x256xi1> to vector<1x256xi1>
    %164 = vector.broadcast %163 : vector<1x256xi1> to vector<8x256xi1>
    %165 = vector.broadcast %cst_56 : f32 to vector<8x256xf32>
    %166 = arith.select %164, %162, %165 : vector<8x256xi1>, vector<8x256xf32>
    %c254_i32_57 = arith.constant 254 : i32
    %167 = tpu.dynamic_rotate %149 by %c254_i32_57 dim 1 : vector<8x256xf32>, i32 -> vector<8x256xf32>
    %cst_58 = arith.constant 0.000000e+00 : f32
    %168 = vector.shape_cast %26 : vector<1x256xi1> to vector<1x256xi1>
    %169 = vector.broadcast %168 : vector<1x256xi1> to vector<8x256xi1>
    %170 = vector.broadcast %cst_58 : f32 to vector<8x256xf32>
    %171 = arith.select %169, %167, %170 : vector<8x256xi1>, vector<8x256xf32>
    %172 = arith.maximumf %166, %171 : vector<8x256xf32>
    %173 = arith.maximumf %161, %172 : vector<8x256xf32>
    %c24 = arith.constant 24 : index
    %c0_59 = arith.constant 0 : index
    %174 = vector.load %arg8[%c24, %c0_59] : memref<32x256xf32, #tpu.memory_space<vmem>>, vector<8x256xf32>
    tpu.vector_store %arg8[%c24, %c0_59], %173 {strides = array<i32>} : memref<32x256xf32, #tpu.memory_space<vmem>>, vector<8x256xf32>,
    %c0_60 = arith.constant 0 : index
    %c0_61 = arith.constant 0 : index
    %175 = vector.load %arg4[%c0_60, %c0_61] : memref<8x32xf32, #tpu.memory_space<vmem>>, vector<8x32xf32>
    %c0_62 = arith.constant 0 : index
    %c0_63 = arith.constant 0 : index
    %176 = vector.load %arg8[%c0_62, %c0_63] : memref<32x256xf32, #tpu.memory_space<vmem>>, vector<32x256xf32>
    %cst_64 = arith.constant dense<0.000000e+00> : vector<8x256xf32>
    %177 = tpu.matmul %175, %176, %cst_64 {dimension_numbers = #tpu.dot_dimension_numbers<[1], [0], [0], [1], [0, 0, 1, 1], [], []>} : vector<8x32xf32>, vector<32x256xf32>, vector<8x256xf32> -> vector<8x256xf32>
    %c0_65 = arith.constant 0 : index
    %c0_66 = arith.constant 0 : index
    %178 = vector.load %arg5[%c0_65, %c0_66] : memref<8x1xf32, #tpu.memory_space<vmem>>, vector<8x1xf32>
    %179 = vector.broadcast %178 : vector<8x1xf32> to vector<8x256xf32>
    %180 = arith.addf %177, %179 : vector<8x256xf32>
    %cst_67 = arith.constant 0.000000e+00 : f32
    %181 = vector.broadcast %cst_67 : f32 to vector<8x256xf32>
    %182 = arith.maximumf %180, %181 : vector<8x256xf32>
    %c0_68 = arith.constant 0 : index
    %c0_69 = arith.constant 0 : index
    %c0_70 = arith.constant 0 : index
    %183 = vector.load %arg7[%c0_68, %c0_69, %c0_70] : memref<1x8x256xf32, #tpu.memory_space<vmem>>, vector<1x8x256xf32>
    %184 = vector.shape_cast %183 : vector<1x8x256xf32> to vector<8x256xf32>
    %185 = vector.shape_cast %182 : vector<8x256xf32> to vector<1x8x256xf32>
    tpu.vector_store %arg7[%c0_68, %c0_69, %c0_70], %185 {strides = array<i32>} : memref<1x8x256xf32, #tpu.memory_space<vmem>>, vector<1x8x256xf32>,
    return
  }
  func.func @transform_0(%arg0: i32) -> (i32, i32, i32) {
    %c0_i32 = arith.constant 0 : i32
    %c0_i32_0 = arith.constant 0 : i32
    %c0_i32_1 = arith.constant 0 : i32
    return %arg0, %c0_i32, %c0_i32_0 : i32, i32, i32
  }
  func.func @transform_1(%arg0: i32) -> (i32, i32) {
    %c0_i32 = arith.constant 0 : i32
    %c0_i32_0 = arith.constant 0 : i32
    %c0_i32_1 = arith.constant 0 : i32
    return %c0_i32, %c0_i32_0 : i32, i32
  }
  func.func @transform_2(%arg0: i32) -> (i32, i32) {
    %c0_i32 = arith.constant 0 : i32
    %c0_i32_0 = arith.constant 0 : i32
    %c0_i32_1 = arith.constant 0 : i32
    return %c0_i32, %c0_i32_0 : i32, i32
  }
  func.func @transform_3(%arg0: i32) -> (i32, i32) {
    %c0_i32 = arith.constant 0 : i32
    %c0_i32_0 = arith.constant 0 : i32
    %c0_i32_1 = arith.constant 0 : i32
    return %c0_i32, %c0_i32_0 : i32, i32
  }
  func.func @transform_4(%arg0: i32) -> (i32, i32) {
    %c0_i32 = arith.constant 0 : i32
    %c0_i32_0 = arith.constant 0 : i32
    %c0_i32_1 = arith.constant 0 : i32
    return %c0_i32, %c0_i32_0 : i32, i32
  }
  func.func @transform_5(%arg0: i32) -> (i32, i32) {
    %c0_i32 = arith.constant 0 : i32
    %c0_i32_0 = arith.constant 0 : i32
    %c0_i32_1 = arith.constant 0 : i32
    return %c0_i32, %c0_i32_0 : i32, i32
  }
  func.func @transform_6(%arg0: i32) -> (i32, i32, i32) {
    %c0_i32 = arith.constant 0 : i32
    %c0_i32_0 = arith.constant 0 : i32
    %c0_i32_1 = arith.constant 0 : i32
    return %arg0, %c0_i32, %c0_i32_0 : i32, i32, i32
  }
}

</mosaic_0001>

<llo_original>
// kernel: tpu_custom_call.1
$region0: #{tpu_custom_call.1}
  #allocation0 [shape = 'u32[]', space=smem, size = 0x4, offset = 0x4, fixed_abs, tag = 'smem constant byte address 0x4 - core index']
  #allocation1 [shape = 'u32[144,128]{1,0:T(1,128)}', space=vmem, size = 0x12000, scoped, tag = 'internal scratch']
  #allocation2 [shape = 'f32[32,256]{1,0:T(8,128)}', space=vmem, size = 0x8000, scoped, tag = 'scratch operand']
  %s0 = inlined_call_operand.vmem [shape: f32[2,4,256], index: 0, kind: input, shape index: {}]
  %s1 = inlined_call_operand.vmem [shape: f32[8,4], index: 1, kind: input, shape index: {}]
  %s2 = inlined_call_operand.vmem [shape: f32[8,1], index: 2, kind: input, shape index: {}]
  %s3 = inlined_call_operand.vmem [shape: f32[8,32], index: 3, kind: input, shape index: {}]
  %s4 = inlined_call_operand.vmem [shape: f32[8,1], index: 4, kind: input, shape index: {}]
  %s5 = inlined_call_operand.vmem [shape: s32[1,256], index: 5, kind: input, shape index: {}]
  %s6 = inlined_call_operand.hbm [shape: f32[2,8,256], index: 6, kind: output, shape index: {}]
  %s7 = sld [smem:[#allocation0]]
  $region57: #{tpu_custom_call.1} parent=0
    _
  %s9 = ssub.s32 1, %s7
  %s10 = scalar_select 0, %s9, %s7
  $region1: #{tpu_custom_call.1} parent=0
    #allocation3 [shape = 'u8[16384]{0}', space=vmem, size = 0x4000, scoped, tag = 'output window, operand 0']
    #allocation4 [shape = 's32[2]{0}', space=sflag, size = 0x8, scoped, tag = 'scoped memory for tpu_custom_call.1']
    %11 = vsyncpa [#allocation4], 0
    %s12 = scalar_lea.sflag [#allocation4], 1
    %13 = vsyncpa %s12, 0
    loop: start=0, step=1, limit=4
    $region2: #{tpu_custom_call.1} parent=1 // loop_pre_header
      _
    $region3: #{tpu_custom_call.1} parent=1 // loop_header
      %s15 = sphi 0, %s19
      %p16 = scmp.ge.s32.totalorder %s15, 4
      %s25 = sphi 0, %s27
      %s28 = sphi 0, %s25
      %s29 = sphi 0, %s28
      %s45 = sphi 0, %s29
      %s49 = sphi 0, %s49
      %s51 = sphi 0, %s49
      %s52 = sphi 0, %s51
      %s66 = sphi 0, %s52
      %s70 = sphi 0, %s70
      %s72 = sphi 0, %s70
      %s73 = sphi 0, %s72
      %s87 = sphi 0, %s73
      %s91 = sphi 0, %s91
      %s93 = sphi 0, %s91
      %s94 = sphi 0, %s93
      %s108 = sphi 0, %s94
      %s112 = sphi 0, %s112
      %s114 = sphi 0, %s112
      %s115 = sphi 0, %s114
      %s129 = sphi 0, %s115
      %s133 = sphi 0, %s133
      %s135 = sphi 0, %s133
      %s136 = sphi 0, %s135
      %s150 = sphi 0, %s136
      %s156 = sphi 0, %s158
      %s159 = sphi 0, %s156
      %s160 = sphi 0, %s159
      %s176 = sphi 0, %s160
    $region4: #{tpu_custom_call.1} parent=1 // loop_header_branch
      %18 = sbr.rel (%p16) target = $region8
    $region5: #{tpu_custom_call.1} parent=1 // loop_body
      %s20 = ssub.s32 %s15, 1
      %s21 = ssub.s32 %s15, 2
      %s22 = sadd.s32 %s15, 1
      %s23 = ssub.s32 %s15, %s22
      %p24 = scmp.eq.s32.totalorder %s23, 0
      %s26 = sadd.s32 %s25, 1
      %s27 = scalar_select %p24, %s25, %s26
      %p30 = pneg %p24
      %p31 = scmp.eq.s32.totalorder %s15, 1
      %p32 = por %p30, %p31
      %p33 = scmp.ne.s32.totalorder %s25, %s28
      %p34 = scmp.eq.s32.totalorder %s15, 0
      %p35 = por %p33, %p34
      %p36 = scmp.ne.s32.totalorder %s25, %s28
      %p37 = scmp.eq.s32.totalorder %s20, 1
      %p38 = por %p36, %p37
      %p39 = scmp.ne.s32.totalorder %s28, %s29
      %p40 = scmp.eq.s32.totalorder %s20, 0
      %p41 = por %p39, %p40
      %p42 = scmp.ne.s32.totalorder %s28, %s29
      %p43 = scmp.eq.s32.totalorder %s21, 1
      %p44 = por %p42, %p43
      %p46 = scmp.ne.s32.totalorder %s29, %s45
      %p47 = scmp.eq.s32.totalorder %s21, 0
      %p48 = por %p46, %p47
      %s50 = sadd.s32 %s49, 1
      %p53 = scmp.eq.s32.totalorder %s15, 1
      %p54 = scmp.ne.s32.totalorder %s49, %s51
      %p55 = scmp.eq.s32.totalorder %s15, 0
      %p56 = por %p54, %p55
      %p57 = scmp.ne.s32.totalorder %s49, %s51
      %p58 = scmp.eq.s32.totalorder %s20, 1
      %p59 = por %p57, %p58
      %p60 = scmp.ne.s32.totalorder %s51, %s52
      %p61 = scmp.eq.s32.totalorder %s20, 0
      %p62 = por %p60, %p61
      %p63 = scmp.ne.s32.totalorder %s51, %s52
      %p64 = scmp.eq.s32.totalorder %s21, 1
      %p65 = por %p63, %p64
      %p67 = scmp.ne.s32.totalorder %s52, %s66
      %p68 = scmp.eq.s32.totalorder %s21, 0
      %p69 = por %p67, %p68
      %s71 = sadd.s32 %s70, 1
      %p74 = scmp.eq.s32.totalorder %s15, 1
      %p75 = scmp.ne.s32.totalorder %s70, %s72
      %p76 = scmp.eq.s32.totalorder %s15, 0
      %p77 = por %p75, %p76
      %p78 = scmp.ne.s32.totalorder %s70, %s72
      %p79 = scmp.eq.s32.totalorder %s20, 1
      %p80 = por %p78, %p79
      %p81 = scmp.ne.s32.totalorder %s72, %s73
      %p82 = scmp.eq.s32.totalorder %s20, 0
      %p83 = por %p81, %p82
      %p84 = scmp.ne.s32.totalorder %s72, %s73
      %p85 = scmp.eq.s32.totalorder %s21, 1
      %p86 = por %p84, %p85
      %p88 = scmp.ne.s32.totalorder %s73, %s87
      %p89 = scmp.eq.s32.totalorder %s21, 0
      %p90 = por %p88, %p89
      %s92 = sadd.s32 %s91, 1
      %p95 = scmp.eq.s32.totalorder %s15, 1
      %p96 = scmp.ne.s32.totalorder %s91, %s93
      %p97 = scmp.eq.s32.totalorder %s15, 0
      %p98 = por %p96, %p97
      %p99 = scmp.ne.s32.totalorder %s91, %s93
      %p100 = scmp.eq.s32.totalorder %s20, 1
      %p101 = por %p99, %p100
      %p102 = scmp.ne.s32.totalorder %s93, %s94
      %p103 = scmp.eq.s32.totalorder %s20, 0
      %p104 = por %p102, %p103
      %p105 = scmp.ne.s32.totalorder %s93, %s94
      %p106 = scmp.eq.s32.totalorder %s21, 1
      %p107 = por %p105, %p106
      %p109 = scmp.ne.s32.totalorder %s94, %s108
      %p110 = scmp.eq.s32.totalorder %s21, 0
      %p111 = por %p109, %p110
      %s113 = sadd.s32 %s112, 1
      %p116 = scmp.eq.s32.totalorder %s15, 1
      %p117 = scmp.ne.s32.totalorder %s112, %s114
      %p118 = scmp.eq.s32.totalorder %s15, 0
      %p119 = por %p117, %p118
      %p120 = scmp.ne.s32.totalorder %s112, %s114
      %p121 = scmp.eq.s32.totalorder %s20, 1
      %p122 = por %p120, %p121
      %p123 = scmp.ne.s32.totalorder %s114, %s115
      %p124 = scmp.eq.s32.totalorder %s20, 0
      %p125 = por %p123, %p124
      %p126 = scmp.ne.s32.totalorder %s114, %s115
      %p127 = scmp.eq.s32.totalorder %s21, 1
      %p128 = por %p126, %p127
      %p130 = scmp.ne.s32.totalorder %s115, %s129
      %p131 = scmp.eq.s32.totalorder %s21, 0
      %p132 = por %p130, %p131
      %s134 = sadd.s32 %s133, 1
      %p137 = scmp.eq.s32.totalorder %s15, 1
      %p138 = scmp.ne.s32.totalorder %s133, %s135
      %p139 = scmp.eq.s32.totalorder %s15, 0
      %p140 = por %p138, %p139
      %p141 = scmp.ne.s32.totalorder %s133, %s135
      %p142 = scmp.eq.s32.totalorder %s20, 1
      %p143 = por %p141, %p142
      %p144 = scmp.ne.s32.totalorder %s135, %s136
      %p145 = scmp.eq.s32.totalorder %s20, 0
      %p146 = por %p144, %p145
      %p147 = scmp.ne.s32.totalorder %s135, %s136
      %p148 = scmp.eq.s32.totalorder %s21, 1
      %p149 = por %p147, %p148
      %p151 = scmp.ne.s32.totalorder %s136, %s150
      %p152 = scmp.eq.s32.totalorder %s21, 0
      %p153 = por %p151, %p152
      %s154 = ssub.s32 %s15, %s22
      %p155 = scmp.eq.s32.totalorder %s154, 0
      %s157 = sadd.s32 %s156, 1
      %s158 = scalar_select %p155, %s156, %s157
      %p161 = pneg %p155
      %p162 = scmp.eq.s32.totalorder %s15, 1
      %p163 = por %p161, %p162
      %p164 = scmp.ne.s32.totalorder %s156, %s159
      %p165 = scmp.eq.s32.totalorder %s15, 0
      %p166 = por %p164, %p165
      %p167 = scmp.ne.s32.totalorder %s156, %s159
      %p168 = scmp.eq.s32.totalorder %s20, 1
      %p169 = por %p167, %p168
      %p170 = scmp.ne.s32.totalorder %s159, %s160
      %p171 = scmp.eq.s32.totalorder %s20, 0
      %p172 = por %p170, %p171
      %p173 = scmp.ne.s32.totalorder %s159, %s160
      %p174 = scmp.eq.s32.totalorder %s21, 1
      %p175 = por %p173, %p174
      %p177 = scmp.ne.s32.totalorder %s160, %s176
      %p178 = scmp.eq.s32.totalorder %s21, 0
      %p179 = por %p177, %p178
      %p180 = scmp.le.s32.totalorder 1, %s15
      %p181 = scmp.lt.s32.totalorder %s15, 3
      %p182 = pnand %p180, %p181
      %p183 = pneg %p182
      // Predicated region
      $region9: #{tpu_custom_call.1} parent=5 // pred_check
        _
      $region10: #{tpu_custom_call.1} parent=5 // pred_check_branch
        %185 = sbr.rel (%p182) target = $region12
      $region11: #{tpu_custom_call.1} parent=5 // pred_region
        %s186 = ssub.s32 %s15, 1
        // Predicated region
        $region13: #{tpu_custom_call.1} parent=11 // pred_check
          %p187 = pneg %p62
        $region14: #{tpu_custom_call.1} parent=11 // pred_check_branch
          %189 = sbr.rel (%p187) target = $region16
        $region15: #{tpu_custom_call.1} parent=11 // pred_region
          _
        $region16: #{tpu_custom_call.1} parent=11 // pred_fallthru
          _
        // Predicated region
        $region17: #{tpu_custom_call.1} parent=11 // pred_check
          %p190 = pneg %p83
        $region18: #{tpu_custom_call.1} parent=11 // pred_check_branch
          %192 = sbr.rel (%p190) target = $region20
        $region19: #{tpu_custom_call.1} parent=11 // pred_region
          _
        $region20: #{tpu_custom_call.1} parent=11 // pred_fallthru
          _
        // Predicated region
        $region21: #{tpu_custom_call.1} parent=11 // pred_check
          %p193 = pneg %p104
        $region22: #{tpu_custom_call.1} parent=11 // pred_check_branch
          %195 = sbr.rel (%p193) target = $region24
        $region23: #{tpu_custom_call.1} parent=11 // pred_region
          _
        $region24: #{tpu_custom_call.1} parent=11 // pred_fallthru
          _
        // Predicated region
        $region25: #{tpu_custom_call.1} parent=11 // pred_check
          %p196 = pneg %p125
        $region26: #{tpu_custom_call.1} parent=11 // pred_check_branch
          %198 = sbr.rel (%p196) target = $region28
        $region27: #{tpu_custom_call.1} parent=11 // pred_region
          _
        $region28: #{tpu_custom_call.1} parent=11 // pred_fallthru
          _
        // Predicated region
        $region29: #{tpu_custom_call.1} parent=11 // pred_check
          %p199 = pneg %p146
        $region30: #{tpu_custom_call.1} parent=11 // pred_check_branch
          %201 = sbr.rel (%p199) target = $region32
        $region31: #{tpu_custom_call.1} parent=11 // pred_region
          _
        $region32: #{tpu_custom_call.1} parent=11 // pred_fallthru
          _
      $region12: #{tpu_custom_call.1} parent=5 // pred_fallthru
        _
      %p202 = scmp.lt.s32.totalorder %s15, 2
      // Predicated region
      $region33: #{tpu_custom_call.1} parent=5 // pred_check
        %p203 = pneg %p202
      $region34: #{tpu_custom_call.1} parent=5 // pred_check_branch
        %205 = sbr.rel (%p203) target = $region36
      $region35: #{tpu_custom_call.1} parent=5 // pred_region
        // Predicated region
        $region37: #{tpu_custom_call.1} parent=35 // pred_check
          %p206 = pneg %p35
        $region38: #{tpu_custom_call.1} parent=35 // pred_check_branch
          %208 = sbr.rel (%p206) target = $region40
        $region39: #{tpu_custom_call.1} parent=35 // pred_region
          %p209 = scmp.lt.s32.totalorder %s15, 1
          %s210 = scalar_select %p209, %s15, 1
          %s211 = smul.addr %s210, 2
          %s212 = smul.addr %s211, 4
          %s213 = scalar_lea.vmem %s0, %s212
        $region40: #{tpu_custom_call.1} parent=35 // pred_fallthru
          _
      $region36: #{tpu_custom_call.1} parent=5 // pred_fallthru
        _
      %p214 = scmp.le.s32.totalorder 1, %s15
      %p215 = scmp.lt.s32.totalorder %s15, 3
      %p216 = pnand %p214, %p215
      %p217 = pneg %p216
      // Predicated region
      $region41: #{tpu_custom_call.1} parent=5 // pred_check
        _
      $region42: #{tpu_custom_call.1} parent=5 // pred_check_branch
        %219 = sbr.rel (%p216) target = $region44
      $region43: #{tpu_custom_call.1} parent=5 // pred_region
        %s220 = ssub.s32 %s15, 1
        %p221 = scmp.lt.s32.totalorder %s20, 1
        %s222 = scalar_select %p221, %s20, 1
        %s223 = smul.addr %s222, 2
        %s224 = smul.addr %s223, 4
        %s225 = scalar_lea.vmem %s0, %s224
        %p226 = pneg %p41
        %p227 = pneg %p38
        %p228 = pneg %p62
        %p229 = pneg %p59
        %p230 = pneg %p83
        %p231 = pneg %p80
        %p232 = pneg %p104
        %p233 = pneg %p101
        %p234 = pneg %p125
        %p235 = pneg %p122
        %p236 = pneg %p146
        %p237 = pneg %p143
        %p238 = pneg %p172
        %p239 = pneg %p169
        %s240 = sand.u32 %s159, 1
        %s241 = scalar_lea.sflag [#allocation4], %s240
        %s242 = sand.u32 %s159, 1
        %s243 = smul.addr %s242, 16
        %s244 = scalar_lea.vmem [#allocation3], %s243
        %p245 = scmp.lt.s32.totalorder %s20, 1
        %s246 = scalar_select %p245, %s20, 1
        %s247 = smul.addr %s246, 2
        %s248 = smul.addr %s247, 4
        %s249 = scalar_lea.vmem %s0, %s248
        %v250 = vld [vmem:[%s249] sm:$0xff]
        %v251 = vld [vmem:[%s1] sm:$0xff]
        %v252 = vld [vmem:[%s2] sm:$0xff]
        %254 = vset.pattern.permute.xlu0 0
        %255 = vperm.xlu0 %254, %v252
        %v256 = vpop.permute.xlu0 %255
        %v259 = vcombine.high %v250, %v250
        %vm260 = vcmask 31744
        %v262 = vsel %vm260, %v251, 0
        %vm264 = vcmask 1043456
        %v265 = vsel %vm264, %v250, 0
        %v267 = vsel %vm264, %v259, 0
        %269 = vmatprep.subr.mxu0 0.0
        %270 = vmatpush1.msra.mxu0 0.0
        %271 = vmatprep.subr.mxu0 0.0
        %272 = vmatpush1.msra.mxu0 0.0
        %273 = vmatprep.subr.mxu0 0.0
        %274 = vmatpush1.msra.mxu0 0.0
        %275 = vmatprep.subr.mxu0 0.0
        %276 = vmatpush1.msra.mxu0 0.0
        %277 = vmatprep.subr.mxu0 0.0
        %278 = vmatpush1.msra.mxu0 0.0
        %279 = vmatprep.subr.mxu0 0.0
        %280 = vmatpush1.msra.mxu0 0.0
        %281 = vmatprep.subr.mxu0 0.0
        %282 = vmatpush1.msra.mxu0 0.0
        %283 = vmatprep.subr.mxu0 0.0
        %284 = vmatpush1.msra.mxu0 0.0
        %285 = vmatprep.subr.mxu0 0.0
        %286 = vmatpush1.msra.mxu0 0.0
        %287 = vmatprep.subr.mxu0 0.0
        %288 = vmatpush1.msra.mxu0 0.0
        %289 = vmatprep.subr.mxu0 0.0
        %290 = vmatpush1.msra.mxu0 0.0
        %291 = vmatprep.subr.mxu0 0.0
        %292 = vmatpush1.msra.mxu0 0.0
        %293 = vmatprep.subr.mxu0 0.0
        %294 = vmatpush1.msra.mxu0 0.0
        %295 = vmatprep.subr.mxu0 0.0
        %296 = vmatpush1.msra.mxu0 0.0
        %297 = vmatprep.subr.mxu0 0.0
        %298 = vmatpush1.msra.mxu0 0.0
        %299 = vmatprep.subr.mxu0 %v267
        %300 = vmatpush1.msra.mxu0 %v265
        %301 = vmatprep.subr.mxu0 0.0
        %302 = vmatpush2.msra.mxu0 0.0
        %303 = vmatprep.subr.mxu0 0.0
        %304 = vmatpush2.msra.mxu0 0.0
        %305 = vmatprep.subr.mxu0 0.0
        %306 = vmatpush2.msra.mxu0 0.0
        %307 = vmatprep.subr.mxu0 0.0
        %308 = vmatpush2.msra.mxu0 0.0
        %309 = vmatprep.subr.mxu0 0.0
        %310 = vmatpush2.msra.mxu0 0.0
        %311 = vmatprep.subr.mxu0 0.0
        %312 = vmatpush2.msra.mxu0 0.0
        %313 = vmatprep.subr.mxu0 0.0
        %314 = vmatpush2.msra.mxu0 0.0
        %315 = vmatprep.subr.mxu0 0.0
        %316 = vmatpush2.msra.mxu0 0.0
        %317 = vmatprep.subr.mxu0 0.0
        %318 = vmatpush2.msra.mxu0 0.0
        %319 = vmatprep.subr.mxu0 0.0
        %320 = vmatpush2.msra.mxu0 0.0
        %321 = vmatprep.subr.mxu0 0.0
        %322 = vmatpush2.msra.mxu0 0.0
        %323 = vmatprep.subr.mxu0 0.0
        %324 = vmatpush2.msra.mxu0 0.0
        %325 = vmatprep.subr.mxu0 0.0
        %326 = vmatpush2.msra.mxu0 0.0
        %327 = vmatprep.subr.mxu0 0.0
        %328 = vmatpush2.msra.mxu0 0.0
        %329 = vmatprep.subr.mxu0 0.0
        %330 = vmatpush2.msra.mxu0 0.0
        %331 = vmatprep.subr.mxu0 0.0
        %332 = vmatpush2.msra.mxu0 0.0
        %333 = vmatprep.mubr.f32.mxu0 0.0
        %334 = vmatmul.mubr.f32.gmra.mxu0 %v262
        %v335 = vpop.f32.mrf.mxu0
        %v336 = vadd.f32 %v256, %v335
        %v337 = vpop.f32.mrf.mxu0
        %v338 = vadd.f32 %v256, %v337
        %339 = vdwg.mxu0
        %v340 = vmax.f32 %v336, 0.0
        %v341 = vmax.f32 %v338, 0.0
        %v342 = vlaneseq
        %v343 = vand.u32 %v342, 127
        %v344 = vadd.s32 %v343, 128
        %v345 = vld [vmem:[%s5] sm:$0x3]
        %vm346 = vcmp.ge.s32.totalorder %v343, 16
        %vm347 = vcmp.ge.s32.totalorder %v344, 16
        %vm348 = vcmp.ge.s32.totalorder %v343, 32
        %vm349 = vcmp.ge.s32.totalorder %v344, 32
        %vm350 = vcmp.lt.s32.totalorder %v343, 240
        %vm351 = vcmp.lt.s32.totalorder %v344, 240
        %vm352 = vcmp.lt.s32.totalorder %v343, 224
        %vm353 = vcmp.lt.s32.totalorder %v344, 224
        %vm354 = vcmp.ge.s32.totalorder %v345, 1
        %vm355 = vcmp.ge.s32.totalorder %v345, 2
        %vm356 = vcmp.lt.s32.totalorder %v345, 15
        %vm357 = vcmp.lt.s32.totalorder %v345, 14
        %358 = vst [vmem:[#allocation2] sm:$0xff] %v340
        %359 = vst [vmem:[#allocation2 + $0x8] sm:$0xff] %v341
        %360 = vrot.lane.b32.xlu0 %v340, 16
        %v361 = vpop.permute.xlu0 %360
        %362 = vrot.lane.b32.xlu0 %v341, 16
        %v363 = vpop.permute.xlu0 %362
        %vm364 = vcmp.lt.s32.totalorder %v343, 16
        %v365 = vsel %vm364, %v361, %v363
        %v366 = vsel %vm364, %v363, %v361
        %v367 = vsel %vm346, 1, 0
        %v368 = vsel %vm347, 1, 0
        %vm369 = vcmp.eq.s32.totalorder %v367, 1
        %vm370 = vcmp.eq.s32.totalorder %v368, 1
        %v371 = vsel %vm369, %v366, 0.0
        %v372 = vsel %vm370, %v365, 0.0
        %373 = vrot.lane.b32.xlu0 %v340, 112
        %v374 = vpop.permute.xlu0 %373
        %375 = vrot.lane.b32.xlu0 %v341, 112
        %v376 = vpop.permute.xlu0 %375
        %vm377 = vcmp.lt.s32.totalorder %v343, 112
        %v378 = vsel %vm377, %v374, %v376
        %v379 = vsel %vm377, %v376, %v374
        %v380 = vsel %vm350, 1, 0
        %v381 = vsel %vm351, 1, 0
        %vm382 = vcmp.eq.s32.totalorder %v380, 1
        %vm383 = vcmp.eq.s32.totalorder %v381, 1
        %v384 = vsel %vm382, %v378, 0.0
        %v385 = vsel %vm383, %v379, 0.0
        %v386 = vmax.f32 %v371, %v384
        %v387 = vmax.f32 %v372, %v385
        %v388 = vmax.f32 %v340, %v386
        %v389 = vmax.f32 %v341, %v387
        %390 = vrot.lane.b32.xlu0 %v340, 32
        %v391 = vpop.permute.xlu0 %390
        %392 = vrot.lane.b32.xlu0 %v341, 32
        %v393 = vpop.permute.xlu0 %392
        %vm394 = vcmp.lt.s32.totalorder %v343, 32
        %v395 = vsel %vm394, %v391, %v393
        %v396 = vsel %vm394, %v393, %v391
        %v397 = vsel %vm348, 1, 0
        %v398 = vsel %vm349, 1, 0
        %vm399 = vcmp.eq.s32.totalorder %v397, 1
        %vm400 = vcmp.eq.s32.totalorder %v398, 1
        %v401 = vsel %vm399, %v396, 0.0
        %v402 = vsel %vm400, %v395, 0.0
        %403 = vrot.lane.b32.xlu0 %v340, 96
        %v404 = vpop.permute.xlu0 %403
        %405 = vrot.lane.b32.xlu0 %v341, 96
        %v406 = vpop.permute.xlu0 %405
        %vm407 = vcmp.lt.s32.totalorder %v343, 96
        %v408 = vsel %vm407, %v404, %v406
        %v409 = vsel %vm407, %v406, %v404
        %v410 = vsel %vm352, 1, 0
        %v411 = vsel %vm353, 1, 0
        %vm412 = vcmp.eq.s32.totalorder %v410, 1
        %vm413 = vcmp.eq.s32.totalorder %v411, 1
        %v414 = vsel %vm412, %v408, 0.0
        %v415 = vsel %vm413, %v409, 0.0
        %v416 = vmax.f32 %v401, %v414
        %v417 = vmax.f32 %v402, %v415
        %v418 = vmax.f32 %v388, %v416
        %v419 = vmax.f32 %v389, %v417
        %420 = vrot.lane.b32.xlu0 %v418, 1
        %v421 = vpop.permute.xlu0 %420
        %422 = vrot.lane.b32.xlu0 %v419, 1
        %v423 = vpop.permute.xlu0 %422
        %vm424 = vcmp.lt.s32.totalorder %v343, 1
        %v425 = vsel %vm424, %v421, %v423
        %v426 = vsel %vm424, %v423, %v421
        %v427 = vsel %vm354, 1, 0
        %v428 = vlaneseq
        %v429 = vshrl.u32 %v428, 7
        %v430 = vsub.s32 0, %v429
        %v431 = vrot.slane %v427, %v430
        %v432 = vlaneseq
        %v433 = vshrl.u32 %v432, 7
        %v434 = vsub.s32 1, %v433
        %v435 = vrot.slane %v427, %v434
        %vm436 = vcmp.eq.s32.totalorder %v431, 1
        %vm437 = vcmp.eq.s32.totalorder %v435, 1
        %v438 = vsel %vm436, %v426, 0.0
        %v439 = vsel %vm437, %v425, 0.0
        %440 = vrot.lane.b32.xlu0 %v418, 127
        %v441 = vpop.permute.xlu0 %440
        %442 = vrot.lane.b32.xlu0 %v419, 127
        %v443 = vpop.permute.xlu0 %442
        %vm444 = vcmp.lt.s32.totalorder %v343, 127
        %v445 = vsel %vm444, %v441, %v443
        %v446 = vsel %vm444, %v443, %v441
        %v447 = vsel %vm356, 1, 0
        %v448 = vlaneseq
        %v449 = vshrl.u32 %v448, 7
        %v450 = vsub.s32 0, %v449
        %v451 = vrot.slane %v447, %v450
        %v452 = vlaneseq
        %v453 = vshrl.u32 %v452, 7
        %v454 = vsub.s32 1, %v453
        %v455 = vrot.slane %v447, %v454
        %vm456 = vcmp.eq.s32.totalorder %v451, 1
        %vm457 = vcmp.eq.s32.totalorder %v455, 1
        %v458 = vsel %vm456, %v445, 0.0
        %v459 = vsel %vm457, %v446, 0.0
        %v460 = vmax.f32 %v438, %v458
        %v461 = vmax.f32 %v439, %v459
        %v462 = vmax.f32 %v418, %v460
        %v463 = vmax.f32 %v419, %v461
        %464 = vrot.lane.b32.xlu0 %v418, 2
        %v465 = vpop.permute.xlu0 %464
        %466 = vrot.lane.b32.xlu0 %v419, 2
        %v467 = vpop.permute.xlu0 %466
        %vm468 = vcmp.lt.s32.totalorder %v343, 2
        %v469 = vsel %vm468, %v465, %v467
        %v470 = vsel %vm468, %v467, %v465
        %v471 = vsel %vm355, 1, 0
        %v472 = vlaneseq
        %v473 = vshrl.u32 %v472, 7
        %v474 = vsub.s32 0, %v473
        %v475 = vrot.slane %v471, %v474
        %v476 = vlaneseq
        %v477 = vshrl.u32 %v476, 7
        %v478 = vsub.s32 1, %v477
        %v479 = vrot.slane %v471, %v478
        %vm480 = vcmp.eq.s32.totalorder %v475, 1
        %vm481 = vcmp.eq.s32.totalorder %v479, 1
        %v482 = vsel %vm480, %v470, 0.0
        %v483 = vsel %vm481, %v469, 0.0
        %484 = vrot.lane.b32.xlu0 %v418, 126
        %v485 = vpop.permute.xlu0 %484
        %486 = vrot.lane.b32.xlu0 %v419, 126
        %v487 = vpop.permute.xlu0 %486
        %vm488 = vcmp.lt.s32.totalorder %v343, 126
        %v489 = vsel %vm488, %v485, %v487
        %v490 = vsel %vm488, %v487, %v485
        %v491 = vsel %vm357, 1, 0
        %v492 = vlaneseq
        %v493 = vshrl.u32 %v492, 7
        %v494 = vsub.s32 0, %v493
        %v495 = vrot.slane %v491, %v494
        %v496 = vlaneseq
        %v497 = vshrl.u32 %v496, 7
        %v498 = vsub.s32 1, %v497
        %v499 = vrot.slane %v491, %v498
        %vm500 = vcmp.eq.s32.totalorder %v495, 1
        %vm501 = vcmp.eq.s32.totalorder %v499, 1
        %v502 = vsel %vm500, %v489, 0.0
        %v503 = vsel %vm501, %v490, 0.0
        %v504 = vmax.f32 %v482, %v502
        %v505 = vmax.f32 %v483, %v503
        %v506 = vmax.f32 %v462, %v504
        %v507 = vmax.f32 %v463, %v505
        %508 = vst [vmem:[#allocation2 + $0x10] sm:$0xff] %v506
        %509 = vst [vmem:[#allocation2 + $0x18] sm:$0xff] %v507
        %510 = vrot.lane.b32.xlu0 %v506, 16
        %v511 = vpop.permute.xlu0 %510
        %512 = vrot.lane.b32.xlu0 %v507, 16
        %v513 = vpop.permute.xlu0 %512
        %v514 = vsel %vm364, %v511, %v513
        %v515 = vsel %vm364, %v513, %v511
        %v516 = vsel %vm369, %v515, 0.0
        %v517 = vsel %vm370, %v514, 0.0
        %518 = vrot.lane.b32.xlu0 %v506, 112
        %v519 = vpop.permute.xlu0 %518
        %520 = vrot.lane.b32.xlu0 %v507, 112
        %v521 = vpop.permute.xlu0 %520
        %v522 = vsel %vm377, %v519, %v521
        %v523 = vsel %vm377, %v521, %v519
        %v524 = vsel %vm382, %v522, 0.0
        %v525 = vsel %vm383, %v523, 0.0
        %v526 = vmax.f32 %v516, %v524
        %v527 = vmax.f32 %v517, %v525
        %v528 = vmax.f32 %v506, %v526
        %v529 = vmax.f32 %v507, %v527
        %530 = vrot.lane.b32.xlu0 %v506, 32
        %v531 = vpop.permute.xlu0 %530
        %532 = vrot.lane.b32.xlu0 %v507, 32
        %v533 = vpop.permute.xlu0 %532
        %v534 = vsel %vm394, %v531, %v533
        %v535 = vsel %vm394, %v533, %v531
        %v536 = vsel %vm399, %v535, 0.0
        %v537 = vsel %vm400, %v534, 0.0
        %538 = vrot.lane.b32.xlu0 %v506, 96
        %v539 = vpop.permute.xlu0 %538
        %540 = vrot.lane.b32.xlu0 %v507, 96
        %v541 = vpop.permute.xlu0 %540
        %v542 = vsel %vm407, %v539, %v541
        %v543 = vsel %vm407, %v541, %v539
        %v544 = vsel %vm412, %v542, 0.0
        %v545 = vsel %vm413, %v543, 0.0
        %v546 = vmax.f32 %v536, %v544
        %v547 = vmax.f32 %v537, %v545
        %v548 = vmax.f32 %v528, %v546
        %v549 = vmax.f32 %v529, %v547
        %550 = vrot.lane.b32.xlu0 %v548, 1
        %v551 = vpop.permute.xlu0 %550
        %552 = vrot.lane.b32.xlu0 %v549, 1
        %v553 = vpop.permute.xlu0 %552
        %v554 = vsel %vm424, %v551, %v553
        %v555 = vsel %vm424, %v553, %v551
        %v556 = vsel %vm436, %v555, 0.0
        %v557 = vsel %vm437, %v554, 0.0
        %558 = vrot.lane.b32.xlu0 %v548, 127
        %v559 = vpop.permute.xlu0 %558
        %560 = vrot.lane.b32.xlu0 %v549, 127
        %v561 = vpop.permute.xlu0 %560
        %v562 = vsel %vm444, %v559, %v561
        %v563 = vsel %vm444, %v561, %v559
        %v564 = vsel %vm456, %v562, 0.0
        %v565 = vsel %vm457, %v563, 0.0
        %v566 = vmax.f32 %v556, %v564
        %v567 = vmax.f32 %v557, %v565
        %v568 = vmax.f32 %v548, %v566
        %v569 = vmax.f32 %v549, %v567
        %570 = vrot.lane.b32.xlu0 %v548, 2
        %v571 = vpop.permute.xlu0 %570
        %572 = vrot.lane.b32.xlu0 %v549, 2
        %v573 = vpop.permute.xlu0 %572
        %v574 = vsel %vm468, %v571, %v573
        %v575 = vsel %vm468, %v573, %v571
        %v576 = vsel %vm480, %v575, 0.0
        %v577 = vsel %vm481, %v574, 0.0
        %578 = vrot.lane.b32.xlu0 %v548, 126
        %v579 = vpop.permute.xlu0 %578
        %580 = vrot.lane.b32.xlu0 %v549, 126
        %v581 = vpop.permute.xlu0 %580
        %v582 = vsel %vm488, %v579, %v581
        %v583 = vsel %vm488, %v581, %v579
        %v584 = vsel %vm500, %v582, 0.0
        %v585 = vsel %vm501, %v583, 0.0
        %v586 = vmax.f32 %v576, %v584
        %v587 = vmax.f32 %v577, %v585
        %v588 = vmax.f32 %v568, %v586
        %v589 = vmax.f32 %v569, %v587
        %590 = vst [vmem:[#allocation2 + $0x20] sm:$0xff] %v588
        %591 = vst [vmem:[#allocation2 + $0x28] sm:$0xff] %v589
        %592 = vrot.lane.b32.xlu0 %v588, 16
        %v593 = vpop.permute.xlu0 %592
        %594 = vrot.lane.b32.xlu0 %v589, 16
        %v595 = vpop.permute.xlu0 %594
        %v596 = vsel %vm364, %v593, %v595
        %v597 = vsel %vm364, %v595, %v593
        %v598 = vsel %vm369, %v597, 0.0
        %v599 = vsel %vm370, %v596, 0.0
        %600 = vrot.lane.b32.xlu0 %v588, 112
        %v601 = vpop.permute.xlu0 %600
        %602 = vrot.lane.b32.xlu0 %v589, 112
        %v603 = vpop.permute.xlu0 %602
        %v604 = vsel %vm377, %v601, %v603
        %v605 = vsel %vm377, %v603, %v601
        %v606 = vsel %vm382, %v604, 0.0
        %v607 = vsel %vm383, %v605, 0.0
        %v608 = vmax.f32 %v598, %v606
        %v609 = vmax.f32 %v599, %v607
        %v610 = vmax.f32 %v588, %v608
        %v611 = vmax.f32 %v589, %v609
        %612 = vrot.lane.b32.xlu0 %v588, 32
        %v613 = vpop.permute.xlu0 %612
        %614 = vrot.lane.b32.xlu0 %v589, 32
        %v615 = vpop.permute.xlu0 %614
        %v616 = vsel %vm394, %v613, %v615
        %v617 = vsel %vm394, %v615, %v613
        %v618 = vsel %vm399, %v617, 0.0
        %v619 = vsel %vm400, %v616, 0.0
        %620 = vrot.lane.b32.xlu0 %v588, 96
        %v621 = vpop.permute.xlu0 %620
        %622 = vrot.lane.b32.xlu0 %v589, 96
        %v623 = vpop.permute.xlu0 %622
        %v624 = vsel %vm407, %v621, %v623
        %v625 = vsel %vm407, %v623, %v621
        %v626 = vsel %vm412, %v624, 0.0
        %v627 = vsel %vm413, %v625, 0.0
        %v628 = vmax.f32 %v618, %v626
        %v629 = vmax.f32 %v619, %v627
        %v630 = vmax.f32 %v610, %v628
        %v631 = vmax.f32 %v611, %v629
        %632 = vrot.lane.b32.xlu0 %v630, 1
        %v633 = vpop.permute.xlu0 %632
        %634 = vrot.lane.b32.xlu0 %v631, 1
        %v635 = vpop.permute.xlu0 %634
        %v636 = vsel %vm424, %v633, %v635
        %v637 = vsel %vm424, %v635, %v633
        %v638 = vsel %vm436, %v637, 0.0
        %v639 = vsel %vm437, %v636, 0.0
        %640 = vrot.lane.b32.xlu0 %v630, 127
        %v641 = vpop.permute.xlu0 %640
        %642 = vrot.lane.b32.xlu0 %v631, 127
        %v643 = vpop.permute.xlu0 %642
        %v644 = vsel %vm444, %v641, %v643
        %v645 = vsel %vm444, %v643, %v641
        %v646 = vsel %vm456, %v644, 0.0
        %v647 = vsel %vm457, %v645, 0.0
        %v648 = vmax.f32 %v638, %v646
        %v649 = vmax.f32 %v639, %v647
        %v650 = vmax.f32 %v630, %v648
        %v651 = vmax.f32 %v631, %v649
        %652 = vrot.lane.b32.xlu0 %v630, 2
        %v653 = vpop.permute.xlu0 %652
        %654 = vrot.lane.b32.xlu0 %v631, 2
        %v655 = vpop.permute.xlu0 %654
        %v656 = vsel %vm468, %v653, %v655
        %v657 = vsel %vm468, %v655, %v653
        %v658 = vsel %vm480, %v657, 0.0
        %v659 = vsel %vm481, %v656, 0.0
        %660 = vrot.lane.b32.xlu0 %v630, 126
        %v661 = vpop.permute.xlu0 %660
        %662 = vrot.lane.b32.xlu0 %v631, 126
        %v663 = vpop.permute.xlu0 %662
        %v664 = vsel %vm488, %v661, %v663
        %v665 = vsel %vm488, %v663, %v661
        %v666 = vsel %vm500, %v664, 0.0
        %v667 = vsel %vm501, %v665, 0.0
        %v668 = vmax.f32 %v658, %v666
        %v669 = vmax.f32 %v659, %v667
        %v670 = vmax.f32 %v650, %v668
        %v671 = vmax.f32 %v651, %v669
        %672 = vst [vmem:[#allocation2 + $0x30] sm:$0xff] %v670
        %673 = vst [vmem:[#allocation2 + $0x38] sm:$0xff] %v671
        %v674 = vld [vmem:[%s3] sm:$0xff]
        %v675 = vld [vmem:[#allocation2] sm:$0xff]
        %v676 = vld [vmem:[#allocation2 + $0x8] sm:$0xff]
        %v677 = vld [vmem:[#allocation2 + $0x10] sm:$0xff]
        %v678 = vld [vmem:[#allocation2 + $0x18] sm:$0xff]
        %v679 = vld [vmem:[#allocation2 + $0x20] sm:$0xff]
        %v680 = vld [vmem:[#allocation2 + $0x28] sm:$0xff]
        %v681 = vld [vmem:[#allocation2 + $0x30] sm:$0xff]
        %v682 = vld [vmem:[#allocation2 + $0x38] sm:$0xff]
        %v683 = vld [vmem:[%s4] sm:$0xff]
        %685 = vset.pattern.permute.xlu0 0
        %686 = vperm.xlu0 %685, %v683
        %v687 = vpop.permute.xlu0 %686
        %vm689 = vcmask 261120
        %v691 = vsel %vm689, %v674, 0
        %693 = vmatprep.subr.mxu0 0.0
        %694 = vmatpush1.msra.mxu0 0.0
        %695 = vmatprep.subr.mxu0 0.0
        %696 = vmatpush1.msra.mxu0 0.0
        %697 = vmatprep.subr.mxu0 0.0
        %698 = vmatpush1.msra.mxu0 0.0
        %699 = vmatprep.subr.mxu0 0.0
        %700 = vmatpush1.msra.mxu0 0.0
        %701 = vmatprep.subr.mxu0 0.0
        %702 = vmatpush1.msra.mxu0 0.0
        %703 = vmatprep.subr.mxu0 0.0
        %704 = vmatpush1.msra.mxu0 0.0
        %705 = vmatprep.subr.mxu0 0.0
        %706 = vmatpush1.msra.mxu0 0.0
        %707 = vmatprep.subr.mxu0 0.0
        %708 = vmatpush1.msra.mxu0 0.0
        %709 = vmatprep.subr.mxu0 0.0
        %710 = vmatpush1.msra.mxu0 0.0
        %711 = vmatprep.subr.mxu0 0.0
        %712 = vmatpush1.msra.mxu0 0.0
        %713 = vmatprep.subr.mxu0 0.0
        %714 = vmatpush1.msra.mxu0 0.0
        %715 = vmatprep.subr.mxu0 0.0
        %716 = vmatpush1.msra.mxu0 0.0
        %717 = vmatprep.subr.mxu0 %v682
        %718 = vmatpush1.msra.mxu0 %v681
        %719 = vmatprep.subr.mxu0 %v680
        %720 = vmatpush1.msra.mxu0 %v679
        %721 = vmatprep.subr.mxu0 %v678
        %722 = vmatpush1.msra.mxu0 %v677
        %723 = vmatprep.subr.mxu0 %v676
        %724 = vmatpush1.msra.mxu0 %v675
        %725 = vmatprep.subr.mxu0 0.0
        %726 = vmatpush2.msra.mxu0 0.0
        %727 = vmatprep.subr.mxu0 0.0
        %728 = vmatpush2.msra.mxu0 0.0
        %729 = vmatprep.subr.mxu0 0.0
        %730 = vmatpush2.msra.mxu0 0.0
        %731 = vmatprep.subr.mxu0 0.0
        %732 = vmatpush2.msra.mxu0 0.0
        %733 = vmatprep.subr.mxu0 0.0
        %734 = vmatpush2.msra.mxu0 0.0
        %735 = vmatprep.subr.mxu0 0.0
        %736 = vmatpush2.msra.mxu0 0.0
        %737 = vmatprep.subr.mxu0 0.0
        %738 = vmatpush2.msra.mxu0 0.0
        %739 = vmatprep.subr.mxu0 0.0
        %740 = vmatpush2.msra.mxu0 0.0
        %741 = vmatprep.subr.mxu0 0.0
        %742 = vmatpush2.msra.mxu0 0.0
        %743 = vmatprep.subr.mxu0 0.0
        %744 = vmatpush2.msra.mxu0 0.0
        %745 = vmatprep.subr.mxu0 0.0
        %746 = vmatpush2.msra.mxu0 0.0
        %747 = vmatprep.subr.mxu0 0.0
        %748 = vmatpush2.msra.mxu0 0.0
        %749 = vmatprep.subr.mxu0 0.0
        %750 = vmatpush2.msra.mxu0 0.0
        %751 = vmatprep.subr.mxu0 0.0
        %752 = vmatpush2.msra.mxu0 0.0
        %753 = vmatprep.subr.mxu0 0.0
        %754 = vmatpush2.msra.mxu0 0.0
        %755 = vmatprep.subr.mxu0 0.0
        %756 = vmatpush2.msra.mxu0 0.0
        %757 = vmatprep.mubr.f32.mxu0 0.0
        %758 = vmatmul.mubr.f32.gmra.mxu0 %v691
        %v759 = vpop.f32.mrf.mxu0
        %v760 = vadd.f32 %v687, %v759
        %v761 = vpop.f32.mrf.mxu0
        %v762 = vadd.f32 %v687, %v761
        %763 = vdwg.mxu0
        %v764 = vmax.f32 %v760, 0.0
        %v765 = vmax.f32 %v762, 0.0
        %766 = vst [vmem:[%s244] sm:$0xff] %v764
        %767 = vst [vmem:[%s244 + $0x8] sm:$0xff] %v765
        %s768 = sand.u32 %s159, 1
        %s769 = scalar_lea.sflag [#allocation4], %s768
        %s770 = sand.u32 %s159, 1
        %s771 = smul.addr %s770, 16
        %s772 = scalar_lea.vmem [#allocation3], %s771
        // Predicated region
        $region45: #{tpu_custom_call.1} parent=43 // pred_check
          %p773 = pneg %p169
        $region46: #{tpu_custom_call.1} parent=43 // pred_check_branch
          %775 = sbr.rel (%p773) target = $region48
        $region47: #{tpu_custom_call.1} parent=43 // pred_region
          %s777 = ssub.s32 256, 256
          %778 = vsyncadd %s769, %s777
          %s779 = smul.addr %s20, 2
          %s780 = smul.addr %s779, 128
          %s781 = scalar_lea.hbm %s6, %s780
          %s783 = sshll.u32 %s772, 4
          %s784 = int_to_ptr.vmem [resolvable:$true] %s783
          %786 = dma.vmem_to_hbm [thread:$0]  %s784, 256, %s781, %s769
        $region48: #{tpu_custom_call.1} parent=43 // pred_fallthru
          _
      $region44: #{tpu_custom_call.1} parent=5 // pred_fallthru
        _
      %p787 = scmp.le.s32.totalorder 2, %s15
      // Predicated region
      $region49: #{tpu_custom_call.1} parent=5 // pred_check
        %p788 = pneg %p787
      $region50: #{tpu_custom_call.1} parent=5 // pred_check_branch
        %790 = sbr.rel (%p788) target = $region52
      $region51: #{tpu_custom_call.1} parent=5 // pred_region
        %s791 = ssub.s32 %s15, 2
        // Predicated region
        $region53: #{tpu_custom_call.1} parent=51 // pred_check
          %p792 = pneg %p175
        $region54: #{tpu_custom_call.1} parent=51 // pred_check_branch
          %794 = sbr.rel (%p792) target = $region56
        $region55: #{tpu_custom_call.1} parent=51 // pred_region
          %s795 = sand.u32 %s160, 1
          %s796 = scalar_lea.sflag [#allocation4], %s795
          %s797 = sand.u32 %s160, 1
          %s798 = smul.addr %s797, 16
          %s799 = scalar_lea.vmem [#allocation3], %s798
          %800 = dma.done %s796, 256
        $region56: #{tpu_custom_call.1} parent=51 // pred_fallthru
          _
      $region52: #{tpu_custom_call.1} parent=5 // pred_fallthru
        _
    $region6: #{tpu_custom_call.1} parent=1 // loop_footer
      %s19 = sadd.s32 1, %s15
    $region7: #{tpu_custom_call.1} parent=1 // loop_footer_branch
      %14 = sbr.rel target = $region3
    $region8: #{tpu_custom_call.1} parent=1 // loop_exit
      _
    %801 = vsyncpa [#allocation4], 1
    %s802 = scalar_lea.sflag [#allocation4], 1
    %803 = vsyncpa %s802, 1

</llo_original>
